<compile_context>
chip_gen: v6e
topology: v6e:2x2x1
jax: 0.10.0
libtpu: 0.0.40
codegen_flags: <defaults>
</compile_context>

<pallas_src>
import functools

import jax
import jax.numpy as jnp
from jax.experimental import pallas as pl
from jax.experimental.pallas import tpu as pltpu

_EPS = 1e-5  # PyTorch BatchNorm2d default


def _sepconv_kernel(lo_ref, hi_ref, dww_ref, pww_ref, bias_ref, o_ref, xh_ref,
                    *, tile_h, out_w, kh_taps, kw_taps, dilation, mxu_dtype):
    """One (batch, row-tile) step: ReLU -> depthwise -> 1x1 matmul -> +bias."""
    pad = dilation
    halo = 2 * pad
    c_in = xh_ref.shape[-1]
    c_out = pww_ref.shape[-1]

    # Assemble the ReLU'd (tile_h + 2*pad, Wp, C) halo slab in f32 scratch.
    # (pad zeros are ReLU-invariant, so ReLU-after-pad == ReLU-before-pad.)
    xh_ref[0:tile_h] = jnp.maximum(lo_ref[0].astype(jnp.float32), 0.0)
    xh_ref[tile_h:tile_h + halo] = jnp.maximum(
        hi_ref[0, 0:halo].astype(jnp.float32), 0.0)

    # Depthwise conv (BN1 pre-folded into the taps). The W/sublane shift is
    # materialized once per kw and reused across the kh taps; the kh shift is
    # a cheap leading-dim slice.
    acc = jnp.zeros((tile_h, out_w, c_in), jnp.float32)
    for kw in range(kw_taps):
        xw = xh_ref[:, kw * dilation:kw * dilation + out_w, :]
        for kh in range(kh_taps):
            tap = dww_ref[kh, kw].astype(jnp.float32).reshape(1, 1, c_in)
            acc = acc + xw[kh * dilation:kh * dilation + tile_h] * tap

    # Pointwise 1x1 conv == matmul over channels (MXU). BN2 is folded into the
    # pointwise weights; both BN shifts are folded into the bias.
    lhs = acc.reshape(tile_h * out_w, c_in).astype(mxu_dtype)
    y = jnp.dot(lhs, pww_ref[...], preferred_element_type=jnp.float32)
    y = y + bias_ref[...].astype(jnp.float32)
    o_ref[0] = y.reshape(tile_h, out_w, c_out).astype(o_ref.dtype)


def _estimate_vmem(th, hi_rows, Wp, W, C, Cout, pad, in_itemsize, out_itemsize):
    """Rough per-step VMEM estimate (double-buffered blocks + temporaries)."""
    f32 = 4
    b = 2 * th * Wp * C * in_itemsize            # main input block (x2 buffers)
    b += 2 * hi_rows * Wp * C * in_itemsize      # halo block (x2 buffers)
    b += 2 * th * W * Cout * out_itemsize        # output block (x2 buffers)
    b += (th + 2 * pad) * Wp * C * f32           # assembled ReLU'd scratch slab
    b += 4 * th * W * C * f32                    # 3 W-shifted copies + acc
    b += 2 * th * W * max(C, Cout) * f32         # matmul operand/result temps
    return b


def _pick_tile_h(H, Wp, W, C, Cout, pad, in_itemsize, out_itemsize,
                 max_tile_h, vmem_budget_bytes):
    """Largest row tile dividing H that fits the VMEM budget.

    The halo block is 2*pad rows when tile_h % (2*pad) == 0, otherwise a full
    tile_h-row block (index i+1) is used as a fallback.
    """
    halo = 2 * pad

    def valid(th):
        return th % halo == 0 or th >= halo

    divisors = [d for d in range(H, 0, -1) if H % d == 0]
    cands = [d for d in divisors
             if valid(d) and (max_tile_h is None or d <= max_tile_h)]
    if not cands:                      # max_tile_h over-constrained -> ignore it
        cands = [d for d in divisors if valid(d)]
    if not cands:
        raise NotImplementedError(
            "separable_conv2d: spatial dim smaller than the dilated kernel halo")
    for th in cands:
        hi = halo if th % halo == 0 else th
        if _estimate_vmem(th, hi, Wp, W, C, Cout, pad,
                          in_itemsize, out_itemsize) <= vmem_budget_bytes:
            return th, hi
    th = cands[-1]
    return th, (halo if th % halo == 0 else th)


def separable_conv2d_nhwc(x_nhwc, dw_w, bn1_gamma, bn1_beta, bn1_mean, bn1_var,
                          pw_w, bn2_gamma, bn2_beta, bn2_mean, bn2_var,
                          *, dilation=1, max_tile_h=None,
                          vmem_budget_bytes=20 * 2**20):
    """NHWC core. dw_w: (C,1,KH,KW); pw_w: (Cout,C,1,1) (PyTorch layouts)."""
    N, H, W, C = x_nhwc.shape
    Cout = int(pw_w.shape[0])
    KH, KW = int(dw_w.shape[2]), int(dw_w.shape[3])
    pad = dilation
    # TODO(synk): stride > 1 and relu_first=False variants not implemented
    # (module defaults are stride=1, relu_first=True); training-mode BN ditto.

    # Zero halo padding (single fused XLA op).
    # TODO(synk): an in-kernel halo DMA (memory_space=pl.ANY) would remove this
    # extra HBM pass entirely.
    xp = jnp.pad(x_nhwc, ((0, 0), (pad, pad), (pad, pad), (0, 0)))
    Hp, Wp = H + 2 * pad, W + 2 * pad

    # Fold both BatchNorms (inference mode) into the conv weights:
    #   out = (dw(x)*s1 + b1) @ pw * s2 + b2
    #       = dw_{w*s1}(x) @ (pw*s2) + (b1 @ (pw*s2) + b2)
    f32 = jnp.float32
    s1 = bn1_gamma.astype(f32) / jnp.sqrt(bn1_var.astype(f32) + _EPS)
    b1 = bn1_beta.astype(f32) - bn1_mean.astype(f32) * s1
    s2 = bn2_gamma.astype(f32) / jnp.sqrt(bn2_var.astype(f32) + _EPS)
    b2 = bn2_beta.astype(f32) - bn2_mean.astype(f32) * s2

    dww = jnp.transpose(dw_w[:, 0, :, :], (1, 2, 0)).astype(f32) * s1   # (KH,KW,C)
    pww = jnp.transpose(pw_w[:, :, 0, 0], (1, 0)).astype(f32) * s2      # (C,Cout)
    bias = (b1 @ pww + b2).reshape(1, Cout)                             # (1,Cout)

    # bf16 MXU operands when the input is bf16 (f32 accumulation); keep f32
    # operands for f32 inputs to preserve tight accuracy.
    mxu_dtype = jnp.bfloat16 if x_nhwc.dtype == jnp.bfloat16 else jnp.float32
    pww = pww.astype(mxu_dtype)

    itemsize = x_nhwc.dtype.itemsize
    tile_h, hi_rows = _pick_tile_h(H, Wp, W, C, Cout, pad, itemsize, itemsize,
                                   max_tile_h, vmem_budget_bytes)
    num_h_tiles = H // tile_h
    hi_stride = tile_h // hi_rows          # exact by construction

    est = _estimate_vmem(tile_h, hi_rows, Wp, W, C, Cout, pad, itemsize, itemsize)
    vmem_limit = int(min(56 * 2**20, max(32 * 2**20, 3 * est)))

    kern = functools.partial(_sepconv_kernel, tile_h=tile_h, out_w=W,
                             kh_taps=KH, kw_taps=KW, dilation=dilation,
                             mxu_dtype=mxu_dtype)

    out = pl.pallas_call(
        kern,
        out_shape=jax.ShapeDtypeStruct((N, H, W, Cout), x_nhwc.dtype),
        grid=(N, num_h_tiles),
        in_specs=[
            # Main row block: padded rows [i*TH, i*TH + TH).
            pl.BlockSpec((1, tile_h, Wp, C), lambda n, i: (n, i, 0, 0)),
            # Halo block: rows starting at padded row (i+1)*TH (first 2*pad used).
            pl.BlockSpec((1, hi_rows, Wp, C),
                         lambda n, i: (n, (i + 1) * hi_stride, 0, 0)),
            pl.BlockSpec((KH, KW, C), lambda n, i: (0, 0, 0)),
            pl.BlockSpec((C, Cout), lambda n, i: (0, 0)),
            pl.BlockSpec((1, Cout), lambda n, i: (0, 0)),
        ],
        out_specs=pl.BlockSpec((1, tile_h, W, Cout), lambda n, i: (n, i, 0, 0)),
        scratch_shapes=[pltpu.VMEM((tile_h + 2 * pad, Wp, C), jnp.float32)],
        compiler_params=pltpu.CompilerParams(
            dimension_semantics=("parallel", "parallel"),
            vmem_limit_bytes=vmem_limit),
    )(xp, xp, dww, pww, bias)
    return out


def separable_conv2d(x_nchw, dw_w, bn1_gamma, bn1_beta, bn1_mean, bn1_var,
                     pw_w, bn2_gamma, bn2_beta, bn2_mean, bn2_var,
                     *, dilation=1, max_tile_h=None):
    """PyTorch-layout entry point: x (N,C,H,W) -> (N,Cout,H,W)."""
    x = jnp.transpose(x_nchw, (0, 2, 3, 1))                      # NHWC
    out = separable_conv2d_nhwc(
        x, dw_w, bn1_gamma, bn1_beta, bn1_mean, bn1_var,
        pw_w, bn2_gamma, bn2_beta, bn2_mean, bn2_var,
        dilation=dilation, max_tile_h=max_tile_h)
    return jnp.transpose(out, (0, 3, 1, 2))                      # back to NCHW


def _reference(x, dw_w, bn1_gamma, bn1_beta, bn1_mean, bn1_var,
               pw_w, bn2_gamma, bn2_beta, bn2_mean, bn2_var, *, dilation=1):
    """Pure-JAX reference (mirrors the PyTorch module in eval mode)."""
    C = x.shape[1]
    xr = jax.nn.relu(x)
    y = jax.lax.conv_general_dilated(
        xr, dw_w, window_strides=(1, 1),
        padding=((dilation, dilation), (dilation, dilation)),
        rhs_dilation=(dilation, dilation), feature_group_count=C,
        dimension_numbers=('NCHW', 'OIHW', 'NCHW'))
    s1 = bn1_gamma / jnp.sqrt(bn1_var + _EPS)
    b1 = bn1_beta - bn1_mean * s1
    y = y * s1.reshape(1, -1, 1, 1) + b1.reshape(1, -1, 1, 1)
    y = jax.lax.conv_general_dilated(
        y, pw_w, window_strides=(1, 1), padding='VALID',
        dimension_numbers=('NCHW', 'OIHW', 'NCHW'))
    s2 = bn2_gamma / jnp.sqrt(bn2_var + _EPS)
    b2 = bn2_beta - bn2_mean * s2
    return y * s2.reshape(1, -1, 1, 1) + b2.reshape(1, -1, 1, 1)


if __name__ == "__main__":
    key = jax.random.PRNGKey(0)
    ks = jax.random.split(key, 11)

    N, Cin, Cout, H, W = 2, 4, 8, 16, 16
    KH = KW = 3

    x = jax.random.normal(ks[0], (N, Cin, H, W), jnp.float32)
    dw_w = jax.random.normal(ks[1], (Cin, 1, KH, KW), jnp.float32) * 0.2
    pw_w = jax.random.normal(ks[2], (Cout, Cin, 1, 1), jnp.float32) * 0.2

    bn1_gamma = jax.random.uniform(ks[3], (Cin,), jnp.float32, 0.5, 1.5)
    bn1_beta = jax.random.normal(ks[4], (Cin,), jnp.float32) * 0.1
    bn1_mean = jax.random.normal(ks[5], (Cin,), jnp.float32) * 0.1
    bn1_var = jax.random.uniform(ks[6], (Cin,), jnp.float32, 0.5, 1.5)

    bn2_gamma = jax.random.uniform(ks[7], (Cout,), jnp.float32, 0.5, 1.5)
    bn2_beta = jax.random.normal(ks[8], (Cout,), jnp.float32) * 0.1
    bn2_mean = jax.random.normal(ks[9], (Cout,), jnp.float32) * 0.1
    bn2_var = jnp.ones((Cout,), jnp.float32)

    params = (dw_w, bn1_gamma, bn1_beta, bn1_mean, bn1_var,
              pw_w, bn2_gamma, bn2_beta, bn2_mean, bn2_var)

    # Cases exercise: the small 2*pad halo block (dilation=1), the dilated halo
    # (dilation=2), and the fallback halo block with a partial last-tile DMA
    # (H=9, tile_h=3 not a multiple of 2*pad).
    x9 = jax.random.normal(ks[10], (1, Cin, 9, 9), jnp.float32)
    cases = [(1, 8, x), (2, 8, x), (1, 3, x9)]
    for dilation, th, xin in cases:
        out = separable_conv2d(xin, *params, dilation=dilation, max_tile_h=th)
        out = jax.block_until_ready(out)
        ref = _reference(xin, *params, dilation=dilation)
        assert out.shape == ref.shape
        assert jnp.allclose(out, ref, atol=1e-4, rtol=1e-4), (
            f"mismatch for dilation={dilation}, max_tile_h={th}")

    print("KERNEL_OK")
</pallas_src>

<mosaic_0001>
module attributes {stable_mosaic.version = 11 : i64} {
  func.func @_sepconv_kernel(%arg0: i32, %arg1: i32, %arg2: memref<1x8x18x4xf32, #tpu.memory_space<vmem>>, %arg3: memref<1x2x18x4xf32, #tpu.memory_space<vmem>>, %arg4: memref<3x3x4xf32, #tpu.memory_space<vmem>>, %arg5: memref<4x8xf32, #tpu.memory_space<vmem>>, %arg6: memref<1x8xf32, #tpu.memory_space<vmem>>, %arg7: memref<1x8x16x8xf32, #tpu.memory_space<vmem>>, %arg8: memref<10x18x4xf32, #tpu.memory_space<vmem>>) attributes {dimension_semantics = [#tpu.dimension_semantics<parallel>, #tpu.dimension_semantics<parallel>], iteration_bounds = array<i64: 2, 2>, scalar_prefetch = 0 : i64, scratch_operands = 1 : i64, tpu.core_type = #tpu.core_type<tc>, window_params = [{transform_indices = @transform_0, window_bounds = array<i64: 1, 8, 18, 4>}, {transform_indices = @transform_1, window_bounds = array<i64: 1, 2, 18, 4>}, {pipeline_mode = #tpu.pipeline_mode<synchronous>, transform_indices = @transform_2, window_bounds = array<i64: 3, 3, 4>}, {pipeline_mode = #tpu.pipeline_mode<synchronous>, transform_indices = @transform_3, window_bounds = array<i64: 4, 8>}, {pipeline_mode = #tpu.pipeline_mode<synchronous>, transform_indices = @transform_4, window_bounds = array<i64: 1, 8>}, {transform_indices = @transform_5, window_bounds = array<i64: 1, 8, 16, 8>}]} {
    %c0 = arith.constant 0 : index
    %c0_0 = arith.constant 0 : index
    %c0_1 = arith.constant 0 : index
    %c0_2 = arith.constant 0 : index
    %0 = vector.load %arg2[%c0, %c0_0, %c0_1, %c0_2] : memref<1x8x18x4xf32, #tpu.memory_space<vmem>>, vector<1x8x18x4xf32>
    %1 = vector.shape_cast %0 : vector<1x8x18x4xf32> to vector<8x18x4xf32>
    %cst = arith.constant 0.000000e+00 : f32
    %2 = vector.broadcast %cst : f32 to vector<8x18x4xf32>
    %3 = arith.maximumf %1, %2 : vector<8x18x4xf32>
    %c0_3 = arith.constant 0 : index
    %c0_4 = arith.constant 0 : index
    %c0_5 = arith.constant 0 : index
    %4 = vector.load %arg8[%c0_3, %c0_4, %c0_5] : memref<10x18x4xf32, #tpu.memory_space<vmem>>, vector<8x18x4xf32>
    tpu.vector_store %arg8[%c0_3, %c0_4, %c0_5], %3 {strides = array<i32>} : memref<10x18x4xf32, #tpu.memory_space<vmem>>, vector<8x18x4xf32>,
    %c0_6 = arith.constant 0 : index
    %c0_7 = arith.constant 0 : index
    %c0_8 = arith.constant 0 : index
    %c0_9 = arith.constant 0 : index
    %5 = vector.load %arg3[%c0_6, %c0_7, %c0_8, %c0_9] : memref<1x2x18x4xf32, #tpu.memory_space<vmem>>, vector<1x2x18x4xf32>
    %6 = vector.shape_cast %5 : vector<1x2x18x4xf32> to vector<2x18x4xf32>
    %cst_10 = arith.constant 0.000000e+00 : f32
    %7 = vector.broadcast %cst_10 : f32 to vector<2x18x4xf32>
    %8 = arith.maximumf %6, %7 : vector<2x18x4xf32>
    %c8 = arith.constant 8 : index
    %c0_11 = arith.constant 0 : index
    %c0_12 = arith.constant 0 : index
    %9 = vector.load %arg8[%c8, %c0_11, %c0_12] : memref<10x18x4xf32, #tpu.memory_space<vmem>>, vector<2x18x4xf32>
    tpu.vector_store %arg8[%c8, %c0_11, %c0_12], %8 {strides = array<i32>} : memref<10x18x4xf32, #tpu.memory_space<vmem>>, vector<2x18x4xf32>,
    %cst_13 = arith.constant 0.000000e+00 : f32
    %10 = vector.broadcast %cst_13 : f32 to vector<8x16x4xf32>
    %c0_14 = arith.constant 0 : index
    %c0_15 = arith.constant 0 : index
    %c0_16 = arith.constant 0 : index
    %11 = vector.load %arg8[%c0_14, %c0_15, %c0_16] : memref<10x18x4xf32, #tpu.memory_space<vmem>>, vector<10x16x4xf32>
    %c0_17 = arith.constant 0 : index
    %c0_18 = arith.constant 0 : index
    %c0_19 = arith.constant 0 : index
    %12 = vector.load %arg4[%c0_17, %c0_18, %c0_19] : memref<3x3x4xf32, #tpu.memory_space<vmem>>, vector<1x1x4xf32>
    %13 = vector.shape_cast %12 : vector<1x1x4xf32> to vector<4xf32>
    %14 = vector.shape_cast %13 : vector<4xf32> to vector<1x1x4xf32>
    %15 = vector.extract_strided_slice %11 {offsets = [0, 0, 0], sizes = [8, 16, 4], strides = [1, 1, 1]} : vector<10x16x4xf32> to vector<8x16x4xf32>
    %16 = vector.broadcast %14 : vector<1x1x4xf32> to vector<8x16x4xf32>
    %17 = arith.mulf %15, %16 : vector<8x16x4xf32>
    %18 = arith.addf %10, %17 : vector<8x16x4xf32>
    %c1 = arith.constant 1 : index
    %c0_20 = arith.constant 0 : index
    %c0_21 = arith.constant 0 : index
    %19 = vector.load %arg4[%c1, %c0_20, %c0_21] : memref<3x3x4xf32, #tpu.memory_space<vmem>>, vector<1x1x4xf32>
    %20 = vector.shape_cast %19 : vector<1x1x4xf32> to vector<4xf32>
    %21 = vector.shape_cast %20 : vector<4xf32> to vector<1x1x4xf32>
    %22 = vector.extract_strided_slice %11 {offsets = [1, 0, 0], sizes = [8, 16, 4], strides = [1, 1, 1]} : vector<10x16x4xf32> to vector<8x16x4xf32>
    %23 = vector.broadcast %21 : vector<1x1x4xf32> to vector<8x16x4xf32>
    %24 = arith.mulf %22, %23 : vector<8x16x4xf32>
    %25 = arith.addf %18, %24 : vector<8x16x4xf32>
    %c2 = arith.constant 2 : index
    %c0_22 = arith.constant 0 : index
    %c0_23 = arith.constant 0 : index
    %26 = vector.load %arg4[%c2, %c0_22, %c0_23] : memref<3x3x4xf32, #tpu.memory_space<vmem>>, vector<1x1x4xf32>
    %27 = vector.shape_cast %26 : vector<1x1x4xf32> to vector<4xf32>
    %28 = vector.shape_cast %27 : vector<4xf32> to vector<1x1x4xf32>
    %29 = vector.extract_strided_slice %11 {offsets = [2, 0, 0], sizes = [8, 16, 4], strides = [1, 1, 1]} : vector<10x16x4xf32> to vector<8x16x4xf32>
    %30 = vector.broadcast %28 : vector<1x1x4xf32> to vector<8x16x4xf32>
    %31 = arith.mulf %29, %30 : vector<8x16x4xf32>
    %32 = arith.addf %25, %31 : vector<8x16x4xf32>
    %c0_24 = arith.constant 0 : index
    %c1_25 = arith.constant 1 : index
    %c0_26 = arith.constant 0 : index
    %33 = vector.load %arg8[%c0_24, %c1_25, %c0_26] : memref<10x18x4xf32, #tpu.memory_space<vmem>>, vector<10x16x4xf32>
    %c0_27 = arith.constant 0 : index
    %c1_28 = arith.constant 1 : index
    %c0_29 = arith.constant 0 : index
    %34 = vector.load %arg4[%c0_27, %c1_28, %c0_29] : memref<3x3x4xf32, #tpu.memory_space<vmem>>, vector<1x1x4xf32>
    %35 = vector.shape_cast %34 : vector<1x1x4xf32> to vector<4xf32>
    %36 = vector.shape_cast %35 : vector<4xf32> to vector<1x1x4xf32>
    %37 = vector.extract_strided_slice %33 {offsets = [0, 0, 0], sizes = [8, 16, 4], strides = [1, 1, 1]} : vector<10x16x4xf32> to vector<8x16x4xf32>
    %38 = vector.broadcast %36 : vector<1x1x4xf32> to vector<8x16x4xf32>
    %39 = arith.mulf %37, %38 : vector<8x16x4xf32>
    %40 = arith.addf %32, %39 : vector<8x16x4xf32>
    %c1_30 = arith.constant 1 : index
    %c1_31 = arith.constant 1 : index
    %c0_32 = arith.constant 0 : index
    %41 = vector.load %arg4[%c1_30, %c1_31, %c0_32] : memref<3x3x4xf32, #tpu.memory_space<vmem>>, vector<1x1x4xf32>
    %42 = vector.shape_cast %41 : vector<1x1x4xf32> to vector<4xf32>
    %43 = vector.shape_cast %42 : vector<4xf32> to vector<1x1x4xf32>
    %44 = vector.extract_strided_slice %33 {offsets = [1, 0, 0], sizes = [8, 16, 4], strides = [1, 1, 1]} : vector<10x16x4xf32> to vector<8x16x4xf32>
    %45 = vector.broadcast %43 : vector<1x1x4xf32> to vector<8x16x4xf32>
    %46 = arith.mulf %44, %45 : vector<8x16x4xf32>
    %47 = arith.addf %40, %46 : vector<8x16x4xf32>
    %c2_33 = arith.constant 2 : index
    %c1_34 = arith.constant 1 : index
    %c0_35 = arith.constant 0 : index
    %48 = vector.load %arg4[%c2_33, %c1_34, %c0_35] : memref<3x3x4xf32, #tpu.memory_space<vmem>>, vector<1x1x4xf32>
    %49 = vector.shape_cast %48 : vector<1x1x4xf32> to vector<4xf32>
    %50 = vector.shape_cast %49 : vector<4xf32> to vector<1x1x4xf32>
    %51 = vector.extract_strided_slice %33 {offsets = [2, 0, 0], sizes = [8, 16, 4], strides = [1, 1, 1]} : vector<10x16x4xf32> to vector<8x16x4xf32>
    %52 = vector.broadcast %50 : vector<1x1x4xf32> to vector<8x16x4xf32>
    %53 = arith.mulf %51, %52 : vector<8x16x4xf32>
    %54 = arith.addf %47, %53 : vector<8x16x4xf32>
    %c0_36 = arith.constant 0 : index
    %c2_37 = arith.constant 2 : index
    %c0_38 = arith.constant 0 : index
    %55 = vector.load %arg8[%c0_36, %c2_37, %c0_38] : memref<10x18x4xf32, #tpu.memory_space<vmem>>, vector<10x16x4xf32>
    %c0_39 = arith.constant 0 : index
    %c2_40 = arith.constant 2 : index
    %c0_41 = arith.constant 0 : index
    %56 = vector.load %arg4[%c0_39, %c2_40, %c0_41] : memref<3x3x4xf32, #tpu.memory_space<vmem>>, vector<1x1x4xf32>
    %57 = vector.shape_cast %56 : vector<1x1x4xf32> to vector<4xf32>
    %58 = vector.shape_cast %57 : vector<4xf32> to vector<1x1x4xf32>
    %59 = vector.extract_strided_slice %55 {offsets = [0, 0, 0], sizes = [8, 16, 4], strides = [1, 1, 1]} : vector<10x16x4xf32> to vector<8x16x4xf32>
    %60 = vector.broadcast %58 : vector<1x1x4xf32> to vector<8x16x4xf32>
    %61 = arith.mulf %59, %60 : vector<8x16x4xf32>
    %62 = arith.addf %54, %61 : vector<8x16x4xf32>
    %c1_42 = arith.constant 1 : index
    %c2_43 = arith.constant 2 : index
    %c0_44 = arith.constant 0 : index
    %63 = vector.load %arg4[%c1_42, %c2_43, %c0_44] : memref<3x3x4xf32, #tpu.memory_space<vmem>>, vector<1x1x4xf32>
    %64 = vector.shape_cast %63 : vector<1x1x4xf32> to vector<4xf32>
    %65 = vector.shape_cast %64 : vector<4xf32> to vector<1x1x4xf32>
    %66 = vector.extract_strided_slice %55 {offsets = [1, 0, 0], sizes = [8, 16, 4], strides = [1, 1, 1]} : vector<10x16x4xf32> to vector<8x16x4xf32>
    %67 = vector.broadcast %65 : vector<1x1x4xf32> to vector<8x16x4xf32>
    %68 = arith.mulf %66, %67 : vector<8x16x4xf32>
    %69 = arith.addf %62, %68 : vector<8x16x4xf32>
    %c2_45 = arith.constant 2 : index
    %c2_46 = arith.constant 2 : index
    %c0_47 = arith.constant 0 : index
    %70 = vector.load %arg4[%c2_45, %c2_46, %c0_47] : memref<3x3x4xf32, #tpu.memory_space<vmem>>, vector<1x1x4xf32>
    %71 = vector.shape_cast %70 : vector<1x1x4xf32> to vector<4xf32>
    %72 = vector.shape_cast %71 : vector<4xf32> to vector<1x1x4xf32>
    %73 = vector.extract_strided_slice %55 {offsets = [2, 0, 0], sizes = [8, 16, 4], strides = [1, 1, 1]} : vector<10x16x4xf32> to vector<8x16x4xf32>
    %74 = vector.broadcast %72 : vector<1x1x4xf32> to vector<8x16x4xf32>
    %75 = arith.mulf %73, %74 : vector<8x16x4xf32>
    %76 = arith.addf %69, %75 : vector<8x16x4xf32>
    %77 = vector.shape_cast %76 : vector<8x16x4xf32> to vector<128x4xf32>
    %c0_48 = arith.constant 0 : index
    %c0_49 = arith.constant 0 : index
    %78 = vector.load %arg5[%c0_48, %c0_49] : memref<4x8xf32, #tpu.memory_space<vmem>>, vector<4x8xf32>
    %cst_50 = arith.constant dense<0.000000e+00> : vector<128x8xf32>
    %79 = tpu.matmul %77, %78, %cst_50 {dimension_numbers = #tpu.dot_dimension_numbers<[1], [0], [0], [1], [0, 0, 1, 1], [], []>} : vector<128x4xf32>, vector<4x8xf32>, vector<128x8xf32> -> vector<128x8xf32>
    %c0_51 = arith.constant 0 : index
    %c0_52 = arith.constant 0 : index
    %80 = vector.load %arg6[%c0_51, %c0_52] : memref<1x8xf32, #tpu.memory_space<vmem>>, vector<1x8xf32>
    %81 = vector.broadcast %80 : vector<1x8xf32> to vector<128x8xf32>
    %82 = arith.addf %79, %81 : vector<128x8xf32>
    %83 = vector.shape_cast %82 : vector<128x8xf32> to vector<8x16x8xf32>
    %c0_53 = arith.constant 0 : index
    %c0_54 = arith.constant 0 : index
    %c0_55 = arith.constant 0 : index
    %c0_56 = arith.constant 0 : index
    %84 = vector.load %arg7[%c0_53, %c0_54, %c0_55, %c0_56] : memref<1x8x16x8xf32, #tpu.memory_space<vmem>>, vector<1x8x16x8xf32>
    %85 = vector.shape_cast %84 : vector<1x8x16x8xf32> to vector<8x16x8xf32>
    %86 = vector.shape_cast %83 : vector<8x16x8xf32> to vector<1x8x16x8xf32>
    tpu.vector_store %arg7[%c0_53, %c0_54, %c0_55, %c0_56], %86 {strides = array<i32>} : memref<1x8x16x8xf32, #tpu.memory_space<vmem>>, vector<1x8x16x8xf32>,
    return
  }
  func.func @transform_0(%arg0: i32, %arg1: i32) -> (i32, i32, i32, i32) {
    %c0_i32 = arith.constant 0 : i32
    %c0_i32_0 = arith.constant 0 : i32
    %c0_i32_1 = arith.constant 0 : i32
    return %arg0, %arg1, %c0_i32, %c0_i32_0 : i32, i32, i32, i32
  }
  func.func @transform_1(%arg0: i32, %arg1: i32) -> (i32, i32, i32, i32) {
    %c1_i32 = arith.constant 1 : i32
    %0 = arith.addi %arg1, %c1_i32 : i32
    %c4_i32 = arith.constant 4 : i32
    %1 = arith.muli %0, %c4_i32 : i32
    %c0_i32 = arith.constant 0 : i32
    %c0_i32_0 = arith.constant 0 : i32
    %c0_i32_1 = arith.constant 0 : i32
    return %arg0, %1, %c0_i32, %c0_i32_0 : i32, i32, i32, i32
  }
  func.func @transform_2(%arg0: i32, %arg1: i32) -> (i32, i32, i32) {
    %c0_i32 = arith.constant 0 : i32
    %c0_i32_0 = arith.constant 0 : i32
    %c0_i32_1 = arith.constant 0 : i32
    %c0_i32_2 = arith.constant 0 : i32
    return %c0_i32, %c0_i32_0, %c0_i32_1 : i32, i32, i32
  }
  func.func @transform_3(%arg0: i32, %arg1: i32) -> (i32, i32) {
    %c0_i32 = arith.constant 0 : i32
    %c0_i32_0 = arith.constant 0 : i32
    %c0_i32_1 = arith.constant 0 : i32
    return %c0_i32, %c0_i32_0 : i32, i32
  }
  func.func @transform_4(%arg0: i32, %arg1: i32) -> (i32, i32) {
    %c0_i32 = arith.constant 0 : i32
    %c0_i32_0 = arith.constant 0 : i32
    %c0_i32_1 = arith.constant 0 : i32
    return %c0_i32, %c0_i32_0 : i32, i32
  }
  func.func @transform_5(%arg0: i32, %arg1: i32) -> (i32, i32, i32, i32) {
    %c0_i32 = arith.constant 0 : i32
    %c0_i32_0 = arith.constant 0 : i32
    %c0_i32_1 = arith.constant 0 : i32
    return %arg0, %arg1, %c0_i32, %c0_i32_0 : i32, i32, i32, i32
  }
}

</mosaic_0001>

<llo_original>
// kernel: tpu_custom_call.1
$region0: #{tpu_custom_call.1}
  #allocation0 [shape = 'u32[]', space=smem, size = 0x4, offset = 0x4, fixed_abs, tag = 'smem constant byte address 0x4 - core index']
  #allocation1 [shape = 'u32[144,128]{1,0:T(1,128)}', space=vmem, size = 0x12000, scoped, tag = 'internal scratch']
  #allocation2 [shape = 'f32[10,18,4]{2,1,0:T(8,128)}', space=vmem, size = 0x1e000, scoped, tag = 'scratch operand']
  %s0 = inlined_call_operand.vmem [shape: f32[2,18,18,4], index: 0, kind: input, shape index: {}]
  %s1 = inlined_call_operand.vmem [shape: f32[2,18,18,4], index: 1, kind: input, shape index: {}]
  %s2 = inlined_call_operand.vmem [shape: f32[3,3,4], index: 2, kind: input, shape index: {}]
  %s3 = inlined_call_operand.vmem [shape: f32[4,8], index: 3, kind: input, shape index: {}]
  %s4 = inlined_call_operand.vmem [shape: f32[1,8], index: 4, kind: input, shape index: {}]
  %s5 = inlined_call_operand.vmem [shape: f32[2,16,16,8], index: 5, kind: output, shape index: {}]
  %s6 = sld [smem:[#allocation0]]
  $region53: #{tpu_custom_call.1} parent=0
    _
  %s8 = ssub.s32 1, %s6
  %s9 = scalar_select 0, %s8, %s6
  loop: start=0, step=1, limit=6
  $region2: #{tpu_custom_call.1} parent=0 // loop_pre_header
    _
  $region3: #{tpu_custom_call.1} parent=0 // loop_header
    %s11 = sphi 0, %s15
    %p12 = scmp.ge.s32.totalorder %s11, 6
    %s18 = sphi 0, %s30
    %s19 = sphi 0, %s26
    %s20 = sphi 0, %s18
    %s21 = sphi 0, %s19
    %s22 = sphi 0, %s20
    %s23 = sphi 0, %s21
    %s35 = sphi 0, %s37
    %s38 = sphi 0, %s35
    %s39 = sphi 0, %s38
    %s55 = sphi 0, %s39
    %s67 = sphi 0, %s69
    %s70 = sphi 0, %s67
    %s71 = sphi 0, %s70
    %s87 = sphi 0, %s71
    %s91 = sphi 0, %s91
    %s93 = sphi 0, %s91
    %s94 = sphi 0, %s93
    %s108 = sphi 0, %s94
    %s112 = sphi 0, %s112
    %s114 = sphi 0, %s112
    %s115 = sphi 0, %s114
    %s129 = sphi 0, %s115
    %s133 = sphi 0, %s133
    %s135 = sphi 0, %s133
    %s136 = sphi 0, %s135
    %s150 = sphi 0, %s136
    %s158 = sphi 0, %s160
    %s161 = sphi 0, %s158
    %s162 = sphi 0, %s161
    %s178 = sphi 0, %s162
  $region4: #{tpu_custom_call.1} parent=0 // loop_header_branch
    %14 = sbr.rel (%p12) target = $region8
  $region5: #{tpu_custom_call.1} parent=0 // loop_body
    %s16 = ssub.s32 %s11, 1
    %s17 = ssub.s32 %s11, 2
    %s24 = sadd.s32 1, %s19
    %p25 = scmp.ge.s32.totalorder %s24, 2
    %s26 = scalar_select %p25, 0, %s24
    %s27 = sadd.s32 1, %s18
    %s28 = scalar_select %p25, %s27, %s18
    %p29 = scmp.ge.s32.totalorder %s28, 2
    %s30 = scalar_select %p29, 0, %s28
    %s31 = ssub.s32 %s18, %s30
    %s32 = ssub.s32 %s19, %s26
    %s33 = sor.u32 %s31, %s32
    %p34 = scmp.eq.s32.totalorder %s33, 0
    %s36 = sadd.s32 %s35, 1
    %s37 = scalar_select %p34, %s35, %s36
    %p40 = pneg %p34
    %p41 = scmp.eq.s32.totalorder %s11, 3
    %p42 = por %p40, %p41
    %p43 = scmp.ne.s32.totalorder %s35, %s38
    %p44 = scmp.eq.s32.totalorder %s11, 0
    %p45 = por %p43, %p44
    %p46 = scmp.ne.s32.totalorder %s35, %s38
    %p47 = scmp.eq.s32.totalorder %s16, 3
    %p48 = por %p46, %p47
    %p49 = scmp.ne.s32.totalorder %s38, %s39
    %p50 = scmp.eq.s32.totalorder %s16, 0
    %p51 = por %p49, %p50
    %p52 = scmp.ne.s32.totalorder %s38, %s39
    %p53 = scmp.eq.s32.totalorder %s17, 3
    %p54 = por %p52, %p53
    %p56 = scmp.ne.s32.totalorder %s39, %s55
    %p57 = scmp.eq.s32.totalorder %s17, 0
    %p58 = por %p56, %p57
    %s59 = sadd.s32 %s19, 1
    %s60 = smul.u32 %s59, 4
    %s61 = sadd.s32 %s26, 1
    %s62 = smul.u32 %s61, 4
    %s63 = ssub.s32 %s18, %s30
    %s64 = ssub.s32 %s60, %s62
    %s65 = sor.u32 %s63, %s64
    %p66 = scmp.eq.s32.totalorder %s65, 0
    %s68 = sadd.s32 %s67, 1
    %s69 = scalar_select %p66, %s67, %s68
    %p72 = pneg %p66
    %p73 = scmp.eq.s32.totalorder %s11, 3
    %p74 = por %p72, %p73
    %p75 = scmp.ne.s32.totalorder %s67, %s70
    %p76 = scmp.eq.s32.totalorder %s11, 0
    %p77 = por %p75, %p76
    %p78 = scmp.ne.s32.totalorder %s67, %s70
    %p79 = scmp.eq.s32.totalorder %s16, 3
    %p80 = por %p78, %p79
    %p81 = scmp.ne.s32.totalorder %s70, %s71
    %p82 = scmp.eq.s32.totalorder %s16, 0
    %p83 = por %p81, %p82
    %p84 = scmp.ne.s32.totalorder %s70, %s71
    %p85 = scmp.eq.s32.totalorder %s17, 3
    %p86 = por %p84, %p85
    %p88 = scmp.ne.s32.totalorder %s71, %s87
    %p89 = scmp.eq.s32.totalorder %s17, 0
    %p90 = por %p88, %p89
    %s92 = sadd.s32 %s91, 1
    %p95 = scmp.eq.s32.totalorder %s11, 3
    %p96 = scmp.ne.s32.totalorder %s91, %s93
    %p97 = scmp.eq.s32.totalorder %s11, 0
    %p98 = por %p96, %p97
    %p99 = scmp.ne.s32.totalorder %s91, %s93
    %p100 = scmp.eq.s32.totalorder %s16, 3
    %p101 = por %p99, %p100
    %p102 = scmp.ne.s32.totalorder %s93, %s94
    %p103 = scmp.eq.s32.totalorder %s16, 0
    %p104 = por %p102, %p103
    %p105 = scmp.ne.s32.totalorder %s93, %s94
    %p106 = scmp.eq.s32.totalorder %s17, 3
    %p107 = por %p105, %p106
    %p109 = scmp.ne.s32.totalorder %s94, %s108
    %p110 = scmp.eq.s32.totalorder %s17, 0
    %p111 = por %p109, %p110
    %s113 = sadd.s32 %s112, 1
    %p116 = scmp.eq.s32.totalorder %s11, 3
    %p117 = scmp.ne.s32.totalorder %s112, %s114
    %p118 = scmp.eq.s32.totalorder %s11, 0
    %p119 = por %p117, %p118
    %p120 = scmp.ne.s32.totalorder %s112, %s114
    %p121 = scmp.eq.s32.totalorder %s16, 3
    %p122 = por %p120, %p121
    %p123 = scmp.ne.s32.totalorder %s114, %s115
    %p124 = scmp.eq.s32.totalorder %s16, 0
    %p125 = por %p123, %p124
    %p126 = scmp.ne.s32.totalorder %s114, %s115
    %p127 = scmp.eq.s32.totalorder %s17, 3
    %p128 = por %p126, %p127
    %p130 = scmp.ne.s32.totalorder %s115, %s129
    %p131 = scmp.eq.s32.totalorder %s17, 0
    %p132 = por %p130, %p131
    %s134 = sadd.s32 %s133, 1
    %p137 = scmp.eq.s32.totalorder %s11, 3
    %p138 = scmp.ne.s32.totalorder %s133, %s135
    %p139 = scmp.eq.s32.totalorder %s11, 0
    %p140 = por %p138, %p139
    %p141 = scmp.ne.s32.totalorder %s133, %s135
    %p142 = scmp.eq.s32.totalorder %s16, 3
    %p143 = por %p141, %p142
    %p144 = scmp.ne.s32.totalorder %s135, %s136
    %p145 = scmp.eq.s32.totalorder %s16, 0
    %p146 = por %p144, %p145
    %p147 = scmp.ne.s32.totalorder %s135, %s136
    %p148 = scmp.eq.s32.totalorder %s17, 3
    %p149 = por %p147, %p148
    %p151 = scmp.ne.s32.totalorder %s136, %s150
    %p152 = scmp.eq.s32.totalorder %s17, 0
    %p153 = por %p151, %p152
    %s154 = ssub.s32 %s18, %s30
    %s155 = ssub.s32 %s19, %s26
    %s156 = sor.u32 %s154, %s155
    %p157 = scmp.eq.s32.totalorder %s156, 0
    %s159 = sadd.s32 %s158, 1
    %s160 = scalar_select %p157, %s158, %s159
    %p163 = pneg %p157
    %p164 = scmp.eq.s32.totalorder %s11, 3
    %p165 = por %p163, %p164
    %p166 = scmp.ne.s32.totalorder %s158, %s161
    %p167 = scmp.eq.s32.totalorder %s11, 0
    %p168 = por %p166, %p167
    %p169 = scmp.ne.s32.totalorder %s158, %s161
    %p170 = scmp.eq.s32.totalorder %s16, 3
    %p171 = por %p169, %p170
    %p172 = scmp.ne.s32.totalorder %s161, %s162
    %p173 = scmp.eq.s32.totalorder %s16, 0
    %p174 = por %p172, %p173
    %p175 = scmp.ne.s32.totalorder %s161, %s162
    %p176 = scmp.eq.s32.totalorder %s17, 3
    %p177 = por %p175, %p176
    %p179 = scmp.ne.s32.totalorder %s162, %s178
    %p180 = scmp.eq.s32.totalorder %s17, 0
    %p181 = por %p179, %p180
    %p182 = scmp.le.s32.totalorder 1, %s11
    %p183 = scmp.lt.s32.totalorder %s11, 5
    %p184 = pnand %p182, %p183
    %p185 = pneg %p184
    // Predicated region
    $region9: #{tpu_custom_call.1} parent=5 // pred_check
      _
    $region10: #{tpu_custom_call.1} parent=5 // pred_check_branch
      %187 = sbr.rel (%p184) target = $region12
    $region11: #{tpu_custom_call.1} parent=5 // pred_region
      %s188 = ssub.s32 %s11, 1
      // Predicated region
      $region13: #{tpu_custom_call.1} parent=11 // pred_check
        %p189 = pneg %p104
      $region14: #{tpu_custom_call.1} parent=11 // pred_check_branch
        %191 = sbr.rel (%p189) target = $region16
      $region15: #{tpu_custom_call.1} parent=11 // pred_region
        _
      $region16: #{tpu_custom_call.1} parent=11 // pred_fallthru
        _
      // Predicated region
      $region17: #{tpu_custom_call.1} parent=11 // pred_check
        %p192 = pneg %p125
      $region18: #{tpu_custom_call.1} parent=11 // pred_check_branch
        %194 = sbr.rel (%p192) target = $region20
      $region19: #{tpu_custom_call.1} parent=11 // pred_region
        _
      $region20: #{tpu_custom_call.1} parent=11 // pred_fallthru
        _
      // Predicated region
      $region21: #{tpu_custom_call.1} parent=11 // pred_check
        %p195 = pneg %p146
      $region22: #{tpu_custom_call.1} parent=11 // pred_check_branch
        %197 = sbr.rel (%p195) target = $region24
      $region23: #{tpu_custom_call.1} parent=11 // pred_region
        _
      $region24: #{tpu_custom_call.1} parent=11 // pred_fallthru
        _
    $region12: #{tpu_custom_call.1} parent=5 // pred_fallthru
      _
    %p198 = scmp.lt.s32.totalorder %s11, 4
    // Predicated region
    $region25: #{tpu_custom_call.1} parent=5 // pred_check
      %p199 = pneg %p198
    $region26: #{tpu_custom_call.1} parent=5 // pred_check_branch
      %201 = sbr.rel (%p199) target = $region28
    $region27: #{tpu_custom_call.1} parent=5 // pred_region
      // Predicated region
      $region29: #{tpu_custom_call.1} parent=27 // pred_check
        %p202 = pneg %p45
      $region30: #{tpu_custom_call.1} parent=27 // pred_check_branch
        %204 = sbr.rel (%p202) target = $region32
      $region31: #{tpu_custom_call.1} parent=27 // pred_region
        %s205 = smul.u32 8, %s19
        %s206 = ssub.s32 18, %s205
        %p207 = scmp.lt.s32.totalorder %s206, 8
        %s208 = scalar_select %p207, %s206, 8
        %s209 = smul.u32 128, %s208
        %s210 = smul.u32 %s209, 3
        %p211 = scmp.lt.s32.totalorder %s18, 1
        %s212 = scalar_select %p211, %s18, 1
        %p213 = scmp.lt.s32.totalorder %s205, 17
        %s214 = scalar_select %p213, %s205, 17
        %s215 = smul.addr %s214, 3
        %s216 = smul.addr %s212, 54
        %s217 = sadd.s32 %s215, %s216
        %s218 = smul.addr %s217, 8
        %s219 = scalar_lea.vmem %s0, %s218
        %s220 = smul.u32 8, %s19
        %s221 = ssub.s32 18, %s220
        %p222 = scmp.lt.s32.totalorder %s221, 8
        %s223 = scalar_select %p222, %s221, 8
        %s224 = smul.u32 128, %s223
        %s225 = smul.u32 %s224, 3
      $region32: #{tpu_custom_call.1} parent=27 // pred_fallthru
        _
      // Predicated region
      $region33: #{tpu_custom_call.1} parent=27 // pred_check
        %p226 = pneg %p77
      $region34: #{tpu_custom_call.1} parent=27 // pred_check_branch
        %228 = sbr.rel (%p226) target = $region36
      $region35: #{tpu_custom_call.1} parent=27 // pred_region
        %s229 = sadd.s32 %s19, 1
        %s230 = smul.u32 %s229, 4
        %s231 = smul.u32 2, %s230
        %p232 = scmp.lt.s32.totalorder %s18, 1
        %s233 = scalar_select %p232, %s18, 1
        %p234 = scmp.lt.s32.totalorder %s231, 17
        %s235 = scalar_select %p234, %s231, 17
        %s236 = smul.addr %s235, 3
        %s237 = smul.addr %s233, 54
        %s238 = sadd.s32 %s236, %s237
        %s239 = smul.addr %s238, 8
        %s240 = scalar_lea.vmem %s1, %s239
        %s241 = sadd.s32 %s19, 1
        %s242 = smul.u32 %s241, 4
        %s243 = smul.u32 2, %s242
      $region36: #{tpu_custom_call.1} parent=27 // pred_fallthru
        _
    $region28: #{tpu_custom_call.1} parent=5 // pred_fallthru
      _
    %p244 = scmp.le.s32.totalorder 1, %s11
    %p245 = scmp.lt.s32.totalorder %s11, 5
    %p246 = pnand %p244, %p245
    %p247 = pneg %p246
    // Predicated region
    $region37: #{tpu_custom_call.1} parent=5 // pred_check
      _
    $region38: #{tpu_custom_call.1} parent=5 // pred_check_branch
      %249 = sbr.rel (%p246) target = $region40
    $region39: #{tpu_custom_call.1} parent=5 // pred_region
      %s250 = ssub.s32 %s11, 1
      %s251 = smul.u32 8, %s21
      %s252 = ssub.s32 18, %s251
      %p253 = scmp.lt.s32.totalorder %s252, 8
      %s254 = scalar_select %p253, %s252, 8
      %s255 = smul.u32 128, %s254
      %s256 = smul.u32 %s255, 3
      %p257 = scmp.lt.s32.totalorder %s20, 1
      %s258 = scalar_select %p257, %s20, 1
      %p259 = scmp.lt.s32.totalorder %s251, 17
      %s260 = scalar_select %p259, %s251, 17
      %s261 = smul.addr %s260, 3
      %s262 = smul.addr %s258, 54
      %s263 = sadd.s32 %s261, %s262
      %s264 = smul.addr %s263, 8
      %s265 = scalar_lea.vmem %s0, %s264
      %p266 = pneg %p51
      %p267 = pneg %p48
      %s268 = sadd.s32 %s21, 1
      %s269 = smul.u32 %s268, 4
      %s270 = smul.u32 2, %s269
      %p271 = scmp.lt.s32.totalorder %s20, 1
      %s272 = scalar_select %p271, %s20, 1
      %p273 = scmp.lt.s32.totalorder %s270, 17
      %s274 = scalar_select %p273, %s270, 17
      %s275 = smul.addr %s274, 3
      %s276 = smul.addr %s272, 54
      %s277 = sadd.s32 %s275, %s276
      %s278 = smul.addr %s277, 8
      %s279 = scalar_lea.vmem %s1, %s278
      %p280 = pneg %p83
      %p281 = pneg %p80
      %p282 = pneg %p104
      %p283 = pneg %p101
      %p284 = pneg %p125
      %p285 = pneg %p122
      %p286 = pneg %p146
      %p287 = pneg %p143
      %p288 = pneg %p174
      %p289 = pneg %p171
      %s290 = smul.u32 8, %s21
      %p291 = scmp.lt.s32.totalorder %s20, 1
      %s292 = scalar_select %p291, %s20, 1
      %p293 = scmp.lt.s32.totalorder %s290, 15
      %s294 = scalar_select %p293, %s290, 15
      %s295 = smul.addr %s294, 2
      %s296 = smul.addr %s292, 32
      %s297 = sadd.s32 %s295, %s296
      %s298 = smul.addr %s297, 8
      %s299 = scalar_lea.vmem %s5, %s298
      %s300 = smul.u32 8, %s21
      %s301 = ssub.s32 18, %s300
      %p302 = scmp.lt.s32.totalorder %s301, 8
      %s303 = scalar_select %p302, %s301, 8
      %s304 = smul.u32 128, %s303
      %s305 = smul.u32 %s304, 3
      %p306 = scmp.lt.s32.totalorder %s20, 1
      %s307 = scalar_select %p306, %s20, 1
      %p308 = scmp.lt.s32.totalorder %s300, 17
      %s309 = scalar_select %p308, %s300, 17
      %s310 = smul.addr %s309, 3
      %s311 = smul.addr %s307, 54
      %s312 = sadd.s32 %s310, %s311
      %s313 = smul.addr %s312, 8
      %s314 = scalar_lea.vmem %s0, %s313
      %s315 = smul.u32 8, %s21
      %s316 = ssub.s32 18, %s315
      %p317 = scmp.lt.s32.totalorder %s316, 8
      %s318 = scalar_select %p317, %s316, 8
      %s319 = smul.u32 128, %s318
      %s320 = smul.u32 %s319, 3
      %s321 = sadd.s32 %s21, 1
      %s322 = smul.u32 %s321, 4
      %s323 = smul.u32 2, %s322
      %p324 = scmp.lt.s32.totalorder %s20, 1
      %s325 = scalar_select %p324, %s20, 1
      %p326 = scmp.lt.s32.totalorder %s323, 17
      %s327 = scalar_select %p326, %s323, 17
      %s328 = smul.addr %s327, 3
      %s329 = smul.addr %s325, 54
      %s330 = sadd.s32 %s328, %s329
      %s331 = smul.addr %s330, 8
      %s332 = scalar_lea.vmem %s1, %s331
      %s333 = sadd.s32 %s21, 1
      %s334 = smul.u32 %s333, 4
      %s335 = smul.u32 2, %s334
      %s336 = smul.u32 8, %s21
      %p337 = scmp.lt.s32.totalorder %s20, 1
      %s338 = scalar_select %p337, %s20, 1
      %p339 = scmp.lt.s32.totalorder %s336, 15
      %s340 = scalar_select %p339, %s336, 15
      %s341 = smul.addr %s340, 2
      %s342 = smul.addr %s338, 32
      %s343 = sadd.s32 %s341, %s342
      %s344 = smul.addr %s343, 8
      %s345 = scalar_lea.vmem %s5, %s344
      %s346 = smul.u32 8, %s21
      %v347 = vld [vmem:[%s314] sm:$0xff]
      %v348 = vld [vmem:[%s314 + $0x8] sm:$0xff]
      %v349 = vld [vmem:[%s314 + $0x10] sm:$0x3]
      %v350 = vld [vmem:[%s314 + $0x18] sm:$0xff]
      %v351 = vld [vmem:[%s314 + $0x20] sm:$0xff]
      %v352 = vld [vmem:[%s314 + $0x28] sm:$0x3]
      %v353 = vld [vmem:[%s314 + $0x30] sm:$0xff]
      %v354 = vld [vmem:[%s314 + $0x38] sm:$0xff]
      %v355 = vld [vmem:[%s314 + $0x40] sm:$0x3]
      %v356 = vld [vmem:[%s314 + $0x48] sm:$0xff]
      %v357 = vld [vmem:[%s314 + $0x50] sm:$0xff]
      %v358 = vld [vmem:[%s314 + $0x58] sm:$0x3]
      %v359 = vld [vmem:[%s314 + $0x60] sm:$0xff]
      %v360 = vld [vmem:[%s314 + $0x68] sm:$0xff]
      %v361 = vld [vmem:[%s314 + $0x70] sm:$0x3]
      %v362 = vld [vmem:[%s314 + $0x78] sm:$0xff]
      %v363 = vld [vmem:[%s314 + $0x80] sm:$0xff]
      %v364 = vld [vmem:[%s314 + $0x88] sm:$0x3]
      %v365 = vld [vmem:[%s314 + $0x90] sm:$0xff]
      %v366 = vld [vmem:[%s314 + $0x98] sm:$0xff]
      %v367 = vld [vmem:[%s314 + $0xa0] sm:$0x3]
      %v368 = vld [vmem:[%s314 + $0xa8] sm:$0xff]
      %v369 = vld [vmem:[%s314 + $0xb0] sm:$0xff]
      %v370 = vld [vmem:[%s314 + $0xb8] sm:$0x3]
      %v371 = vmax.f32 %v347, 0.0
      %v372 = vmax.f32 %v348, 0.0
      %v373 = vmax.f32 %v349, 0.0
      %v374 = vmax.f32 %v350, 0.0
      %v375 = vmax.f32 %v351, 0.0
      %v376 = vmax.f32 %v352, 0.0
      %v377 = vmax.f32 %v353, 0.0
      %v378 = vmax.f32 %v354, 0.0
      %v379 = vmax.f32 %v355, 0.0
      %v380 = vmax.f32 %v356, 0.0
      %v381 = vmax.f32 %v357, 0.0
      %v382 = vmax.f32 %v358, 0.0
      %v383 = vmax.f32 %v359, 0.0
      %v384 = vmax.f32 %v360, 0.0
      %v385 = vmax.f32 %v361, 0.0
      %v386 = vmax.f32 %v362, 0.0
      %v387 = vmax.f32 %v363, 0.0
      %v388 = vmax.f32 %v364, 0.0
      %v389 = vmax.f32 %v365, 0.0
      %v390 = vmax.f32 %v366, 0.0
      %v391 = vmax.f32 %v367, 0.0
      %v392 = vmax.f32 %v368, 0.0
      %v393 = vmax.f32 %v369, 0.0
      %v394 = vmax.f32 %v370, 0.0
      %vm395 = vcmask 31744
      %396 = vst.msk [vmem:[#allocation2] sm:$0xff] %vm395, %v371
      %397 = vst.msk [vmem:[#allocation2 + $0x8] sm:$0xff] %vm395, %v372
      %vm398 = vcmask 25600
      %399 = vst.msk [vmem:[#allocation2 + $0x10] sm:$0x3] %vm398, %v373
      %400 = vst.msk [vmem:[#allocation2 + $0x18] sm:$0xff] %vm395, %v374
      %401 = vst.msk [vmem:[#allocation2 + $0x20] sm:$0xff] %vm395, %v375
      %402 = vst.msk [vmem:[#allocation2 + $0x28] sm:$0x3] %vm398, %v376
      %403 = vst.msk [vmem:[#allocation2 + $0x30] sm:$0xff] %vm395, %v377
      %404 = vst.msk [vmem:[#allocation2 + $0x38] sm:$0xff] %vm395, %v378
      %405 = vst.msk [vmem:[#allocation2 + $0x40] sm:$0x3] %vm398, %v379
      %406 = vst.msk [vmem:[#allocation2 + $0x48] sm:$0xff] %vm395, %v380
      %407 = vst.msk [vmem:[#allocation2 + $0x50] sm:$0xff] %vm395, %v381
      %408 = vst.msk [vmem:[#allocation2 + $0x58] sm:$0x3] %vm398, %v382
      %409 = vst.msk [vmem:[#allocation2 + $0x60] sm:$0xff] %vm395, %v383
      %410 = vst.msk [vmem:[#allocation2 + $0x68] sm:$0xff] %vm395, %v384
      %411 = vst.msk [vmem:[#allocation2 + $0x70] sm:$0x3] %vm398, %v385
      %412 = vst.msk [vmem:[#allocation2 + $0x78] sm:$0xff] %vm395, %v386
      %413 = vst.msk [vmem:[#allocation2 + $0x80] sm:$0xff] %vm395, %v387
      %414 = vst.msk [vmem:[#allocation2 + $0x88] sm:$0x3] %vm398, %v388
      %415 = vst.msk [vmem:[#allocation2 + $0x90] sm:$0xff] %vm395, %v389
      %416 = vst.msk [vmem:[#allocation2 + $0x98] sm:$0xff] %vm395, %v390
      %417 = vst.msk [vmem:[#allocation2 + $0xa0] sm:$0x3] %vm398, %v391
      %418 = vst.msk [vmem:[#allocation2 + $0xa8] sm:$0xff] %vm395, %v392
      %419 = vst.msk [vmem:[#allocation2 + $0xb0] sm:$0xff] %vm395, %v393
      %420 = vst.msk [vmem:[#allocation2 + $0xb8] sm:$0x3] %vm398, %v394
      %v421 = vld [vmem:[%s332] sm:$0xff]
      %v422 = vld [vmem:[%s332 + $0x8] sm:$0xff]
      %v423 = vld [vmem:[%s332 + $0x10] sm:$0x3]
      %v424 = vld [vmem:[%s332 + $0x18] sm:$0xff]
      %v425 = vld [vmem:[%s332 + $0x20] sm:$0xff]
      %v426 = vld [vmem:[%s332 + $0x28] sm:$0x3]
      %v427 = vmax.f32 %v421, 0.0
      %v428 = vmax.f32 %v422, 0.0
      %v429 = vmax.f32 %v423, 0.0
      %v430 = vmax.f32 %v424, 0.0
      %v431 = vmax.f32 %v425, 0.0
      %v432 = vmax.f32 %v426, 0.0
      %s433 = scalar_lea.vmem [#allocation2], 192
      %434 = vst.msk [vmem:[%s433] sm:$0xff] %vm395, %v427
      %435 = vst.msk [vmem:[%s433 + $0x8] sm:$0xff] %vm395, %v428
      %436 = vst.msk [vmem:[%s433 + $0x10] sm:$0x3] %vm398, %v429
      %437 = vst.msk [vmem:[%s433 + $0x18] sm:$0xff] %vm395, %v430
      %438 = vst.msk [vmem:[%s433 + $0x20] sm:$0xff] %vm395, %v431
      %439 = vst.msk [vmem:[%s433 + $0x28] sm:$0x3] %vm398, %v432
      %v440 = vld [vmem:[#allocation2] sm:$0xff]
      %v441 = vld [vmem:[#allocation2 + $0x8] sm:$0xff]
      %v442 = vld [vmem:[#allocation2 + $0x18] sm:$0xff]
      %v443 = vld [vmem:[#allocation2 + $0x20] sm:$0xff]
      %v444 = vld [vmem:[#allocation2 + $0x30] sm:$0xff]
      %v445 = vld [vmem:[#allocation2 + $0x38] sm:$0xff]
      %v446 = vld [vmem:[#allocation2 + $0x48] sm:$0xff]
      %v447 = vld [vmem:[#allocation2 + $0x50] sm:$0xff]
      %v448 = vld [vmem:[#allocation2 + $0x60] sm:$0xff]
      %v449 = vld [vmem:[#allocation2 + $0x68] sm:$0xff]
      %v450 = vld [vmem:[#allocation2 + $0x78] sm:$0xff]
      %v451 = vld [vmem:[#allocation2 + $0x80] sm:$0xff]
      %v452 = vld [vmem:[#allocation2 + $0x90] sm:$0xff]
      %v453 = vld [vmem:[#allocation2 + $0x98] sm:$0xff]
      %v454 = vld [vmem:[#allocation2 + $0xa8] sm:$0xff]
      %v455 = vld [vmem:[#allocation2 + $0xb0] sm:$0xff]
      %v456 = vld [vmem:[#allocation2 + $0xc0] sm:$0xff]
      %v457 = vld [vmem:[#allocation2 + $0xc8] sm:$0xff]
      %v458 = vld [vmem:[#allocation2 + $0xd8] sm:$0xff]
      %v459 = vld [vmem:[#allocation2 + $0xe0] sm:$0xff]
      %v460 = vld [vmem:[%s2] sm:$0x1]
      %v461 = vlaneseq
      %v462 = vshrl.u32 %v461, 7
      %v463 = vsub.s32 0, %v462
      %v464 = vrot.slane %v460, %v463
      %v465 = vmul.f32 %v440, %v464
      %v466 = vmul.f32 %v441, %v464
      %v467 = vmul.f32 %v442, %v464
      %v468 = vmul.f32 %v443, %v464
      %v469 = vmul.f32 %v444, %v464
      %v470 = vmul.f32 %v445, %v464
      %v471 = vmul.f32 %v446, %v464
      %v472 = vmul.f32 %v447, %v464
      %v473 = vmul.f32 %v448, %v464
      %v474 = vmul.f32 %v449, %v464
      %v475 = vmul.f32 %v450, %v464
      %v476 = vmul.f32 %v451, %v464
      %v477 = vmul.f32 %v452, %v464
      %v478 = vmul.f32 %v453, %v464
      %v479 = vmul.f32 %v454, %v464
      %v480 = vmul.f32 %v455, %v464
      %v481 = vadd.f32 %v465, 0.0
      %v482 = vadd.f32 %v466, 0.0
      %v483 = vadd.f32 %v467, 0.0
      %v484 = vadd.f32 %v468, 0.0
      %v485 = vadd.f32 %v469, 0.0
      %v486 = vadd.f32 %v470, 0.0
      %v487 = vadd.f32 %v471, 0.0
      %v488 = vadd.f32 %v472, 0.0
      %v489 = vadd.f32 %v473, 0.0
      %v490 = vadd.f32 %v474, 0.0
      %v491 = vadd.f32 %v475, 0.0
      %v492 = vadd.f32 %v476, 0.0
      %v493 = vadd.f32 %v477, 0.0
      %v494 = vadd.f32 %v478, 0.0
      %v495 = vadd.f32 %v479, 0.0
      %v496 = vadd.f32 %v480, 0.0
      %s497 = scalar_lea.vmem %s2, 4
      %v498 = vld [vmem:[%s497] sm:$0x1]
      %v499 = vlaneseq
      %v500 = vshrl.u32 %v499, 7
      %v501 = vsub.s32 0, %v500
      %v502 = vrot.slane %v498, %v501
      %v503 = vmul.f32 %v442, %v502
      %v504 = vmul.f32 %v443, %v502
      %v505 = vmul.f32 %v444, %v502
      %v506 = vmul.f32 %v445, %v502
      %v507 = vmul.f32 %v446, %v502
      %v508 = vmul.f32 %v447, %v502
      %v509 = vmul.f32 %v448, %v502
      %v510 = vmul.f32 %v449, %v502
      %v511 = vmul.f32 %v450, %v502
      %v512 = vmul.f32 %v451, %v502
      %v513 = vmul.f32 %v452, %v502
      %v514 = vmul.f32 %v453, %v502
      %v515 = vmul.f32 %v454, %v502
      %v516 = vmul.f32 %v455, %v502
      %v517 = vmul.f32 %v456, %v502
      %v518 = vmul.f32 %v457, %v502
      %v519 = vadd.f32 %v481, %v503
      %v520 = vadd.f32 %v482, %v504
      %v521 = vadd.f32 %v483, %v505
      %v522 = vadd.f32 %v484, %v506
      %v523 = vadd.f32 %v485, %v507
      %v524 = vadd.f32 %v486, %v508
      %v525 = vadd.f32 %v487, %v509
      %v526 = vadd.f32 %v488, %v510
      %v527 = vadd.f32 %v489, %v511
      %v528 = vadd.f32 %v490, %v512
      %v529 = vadd.f32 %v491, %v513
      %v530 = vadd.f32 %v492, %v514
      %v531 = vadd.f32 %v493, %v515
      %v532 = vadd.f32 %v494, %v516
      %v533 = vadd.f32 %v495, %v517
      %v534 = vadd.f32 %v496, %v518
      %s535 = scalar_lea.vmem %s2, 8
      %v536 = vld [vmem:[%s535] sm:$0x1]
      %v537 = vlaneseq
      %v538 = vshrl.u32 %v537, 7
      %v539 = vsub.s32 0, %v538
      %v540 = vrot.slane %v536, %v539
      %v541 = vmul.f32 %v444, %v540
      %v542 = vmul.f32 %v445, %v540
      %v543 = vmul.f32 %v446, %v540
      %v544 = vmul.f32 %v447, %v540
      %v545 = vmul.f32 %v448, %v540
      %v546 = vmul.f32 %v449, %v540
      %v547 = vmul.f32 %v450, %v540
      %v548 = vmul.f32 %v451, %v540
      %v549 = vmul.f32 %v452, %v540
      %v550 = vmul.f32 %v453, %v540
      %v551 = vmul.f32 %v454, %v540
      %v552 = vmul.f32 %v455, %v540
      %v553 = vmul.f32 %v456, %v540
      %v554 = vmul.f32 %v457, %v540
      %v555 = vmul.f32 %v458, %v540
      %v556 = vmul.f32 %v459, %v540
      %v557 = vadd.f32 %v519, %v541
      %v558 = vadd.f32 %v520, %v542
      %v559 = vadd.f32 %v521, %v543
      %v560 = vadd.f32 %v522, %v544
      %v561 = vadd.f32 %v523, %v545
      %v562 = vadd.f32 %v524, %v546
      %v563 = vadd.f32 %v525, %v547
      %v564 = vadd.f32 %v526, %v548
      %v565 = vadd.f32 %v527, %v549
      %v566 = vadd.f32 %v528, %v550
      %v567 = vadd.f32 %v529, %v551
      %v568 = vadd.f32 %v530, %v552
      %v569 = vadd.f32 %v531, %v553
      %v570 = vadd.f32 %v532, %v554
      %v571 = vadd.f32 %v533, %v555
      %v572 = vadd.f32 %v534, %v556
      %v573 = vld [vmem:[#allocation2 + $0x1] sm:$0xff]
      %v574 = vld [vmem:[#allocation2 + $0x9] sm:$0xff]
      %v575 = vld [vmem:[#allocation2 + $0x19] sm:$0xff]
      %v576 = vld [vmem:[#allocation2 + $0x21] sm:$0xff]
      %v577 = vld [vmem:[#allocation2 + $0x31] sm:$0xff]
      %v578 = vld [vmem:[#allocation2 + $0x39] sm:$0xff]
      %v579 = vld [vmem:[#allocation2 + $0x49] sm:$0xff]
      %v580 = vld [vmem:[#allocation2 + $0x51] sm:$0xff]
      %v581 = vld [vmem:[#allocation2 + $0x61] sm:$0xff]
      %v582 = vld [vmem:[#allocation2 + $0x69] sm:$0xff]
      %v583 = vld [vmem:[#allocation2 + $0x79] sm:$0xff]
      %v584 = vld [vmem:[#allocation2 + $0x81] sm:$0xff]
      %v585 = vld [vmem:[#allocation2 + $0x91] sm:$0xff]
      %v586 = vld [vmem:[#allocation2 + $0x99] sm:$0xff]
      %v587 = vld [vmem:[#allocation2 + $0xa9] sm:$0xff]
      %v588 = vld [vmem:[#allocation2 + $0xb1] sm:$0xff]
      %v589 = vld [vmem:[#allocation2 + $0xc1] sm:$0xff]
      %v590 = vld [vmem:[#allocation2 + $0xc9] sm:$0xff]
      %v591 = vld [vmem:[#allocation2 + $0xd9] sm:$0xff]
      %v592 = vld [vmem:[#allocation2 + $0xe1] sm:$0xff]
      %v593 = vld [vmem:[%s2 + $0x1] sm:$0x1]
      %v594 = vlaneseq
      %v595 = vshrl.u32 %v594, 7
      %v596 = vsub.s32 0, %v595
      %v597 = vrot.slane %v593, %v596
      %v598 = vmul.f32 %v573, %v597
      %v599 = vmul.f32 %v574, %v597
      %v600 = vmul.f32 %v575, %v597
      %v601 = vmul.f32 %v576, %v597
      %v602 = vmul.f32 %v577, %v597
      %v603 = vmul.f32 %v578, %v597
      %v604 = vmul.f32 %v579, %v597
      %v605 = vmul.f32 %v580, %v597
      %v606 = vmul.f32 %v581, %v597
      %v607 = vmul.f32 %v582, %v597
      %v608 = vmul.f32 %v583, %v597
      %v609 = vmul.f32 %v584, %v597
      %v610 = vmul.f32 %v585, %v597
      %v611 = vmul.f32 %v586, %v597
      %v612 = vmul.f32 %v587, %v597
      %v613 = vmul.f32 %v588, %v597
      %v614 = vadd.f32 %v557, %v598
      %v615 = vadd.f32 %v558, %v599
      %v616 = vadd.f32 %v559, %v600
      %v617 = vadd.f32 %v560, %v601
      %v618 = vadd.f32 %v561, %v602
      %v619 = vadd.f32 %v562, %v603
      %v620 = vadd.f32 %v563, %v604
      %v621 = vadd.f32 %v564, %v605
      %v622 = vadd.f32 %v565, %v606
      %v623 = vadd.f32 %v566, %v607
      %v624 = vadd.f32 %v567, %v608
      %v625 = vadd.f32 %v568, %v609
      %v626 = vadd.f32 %v569, %v610
      %v627 = vadd.f32 %v570, %v611
      %v628 = vadd.f32 %v571, %v612
      %v629 = vadd.f32 %v572, %v613
      %v630 = vld [vmem:[%s497 + $0x1] sm:$0x1]
      %v631 = vlaneseq
      %v632 = vshrl.u32 %v631, 7
      %v633 = vsub.s32 0, %v632
      %v634 = vrot.slane %v630, %v633
      %v635 = vmul.f32 %v575, %v634
      %v636 = vmul.f32 %v576, %v634
      %v637 = vmul.f32 %v577, %v634
      %v638 = vmul.f32 %v578, %v634
      %v639 = vmul.f32 %v579, %v634
      %v640 = vmul.f32 %v580, %v634
      %v641 = vmul.f32 %v581, %v634
      %v642 = vmul.f32 %v582, %v634
      %v643 = vmul.f32 %v583, %v634
      %v644 = vmul.f32 %v584, %v634
      %v645 = vmul.f32 %v585, %v634
      %v646 = vmul.f32 %v586, %v634
      %v647 = vmul.f32 %v587, %v634
      %v648 = vmul.f32 %v588, %v634
      %v649 = vmul.f32 %v589, %v634
      %v650 = vmul.f32 %v590, %v634
      %v651 = vadd.f32 %v614, %v635
      %v652 = vadd.f32 %v615, %v636
      %v653 = vadd.f32 %v616, %v637
      %v654 = vadd.f32 %v617, %v638
      %v655 = vadd.f32 %v618, %v639
      %v656 = vadd.f32 %v619, %v640
      %v657 = vadd.f32 %v620, %v641
      %v658 = vadd.f32 %v621, %v642
      %v659 = vadd.f32 %v622, %v643
      %v660 = vadd.f32 %v623, %v644
      %v661 = vadd.f32 %v624, %v645
      %v662 = vadd.f32 %v625, %v646
      %v663 = vadd.f32 %v626, %v647
      %v664 = vadd.f32 %v627, %v648
      %v665 = vadd.f32 %v628, %v649
      %v666 = vadd.f32 %v629, %v650
      %v667 = vld [vmem:[%s535 + $0x1] sm:$0x1]
      %v668 = vlaneseq
      %v669 = vshrl.u32 %v668, 7
      %v670 = vsub.s32 0, %v669
      %v671 = vrot.slane %v667, %v670
      %v672 = vmul.f32 %v577, %v671
      %v673 = vmul.f32 %v578, %v671
      %v674 = vmul.f32 %v579, %v671
      %v675 = vmul.f32 %v580, %v671
      %v676 = vmul.f32 %v581, %v671
      %v677 = vmul.f32 %v582, %v671
      %v678 = vmul.f32 %v583, %v671
      %v679 = vmul.f32 %v584, %v671
      %v680 = vmul.f32 %v585, %v671
      %v681 = vmul.f32 %v586, %v671
      %v682 = vmul.f32 %v587, %v671
      %v683 = vmul.f32 %v588, %v671
      %v684 = vmul.f32 %v589, %v671
      %v685 = vmul.f32 %v590, %v671
      %v686 = vmul.f32 %v591, %v671
      %v687 = vmul.f32 %v592, %v671
      %v688 = vadd.f32 %v651, %v672
      %v689 = vadd.f32 %v652, %v673
      %v690 = vadd.f32 %v653, %v674
      %v691 = vadd.f32 %v654, %v675
      %v692 = vadd.f32 %v655, %v676
      %v693 = vadd.f32 %v656, %v677
      %v694 = vadd.f32 %v657, %v678
      %v695 = vadd.f32 %v658, %v679
      %v696 = vadd.f32 %v659, %v680
      %v697 = vadd.f32 %v660, %v681
      %v698 = vadd.f32 %v661, %v682
      %v699 = vadd.f32 %v662, %v683
      %v700 = vadd.f32 %v663, %v684
      %v701 = vadd.f32 %v664, %v685
      %v702 = vadd.f32 %v665, %v686
      %v703 = vadd.f32 %v666, %v687
      %v704 = vld [vmem:[#allocation2 + $0x2] sm:$0xff]
      %v705 = vld [vmem:[#allocation2 + $0xa] sm:$0xff]
      %v706 = vld [vmem:[#allocation2 + $0x1a] sm:$0xff]
      %v707 = vld [vmem:[#allocation2 + $0x22] sm:$0xff]
      %v708 = vld [vmem:[#allocation2 + $0x32] sm:$0xff]
      %v709 = vld [vmem:[#allocation2 + $0x3a] sm:$0xff]
      %v710 = vld [vmem:[#allocation2 + $0x4a] sm:$0xff]
      %v711 = vld [vmem:[#allocation2 + $0x52] sm:$0xff]
      %v712 = vld [vmem:[#allocation2 + $0x62] sm:$0xff]
      %v713 = vld [vmem:[#allocation2 + $0x6a] sm:$0xff]
      %v714 = vld [vmem:[#allocation2 + $0x7a] sm:$0xff]
      %v715 = vld [vmem:[#allocation2 + $0x82] sm:$0xff]
      %v716 = vld [vmem:[#allocation2 + $0x92] sm:$0xff]
      %v717 = vld [vmem:[#allocation2 + $0x9a] sm:$0xff]
      %v718 = vld [vmem:[#allocation2 + $0xaa] sm:$0xff]
      %v719 = vld [vmem:[#allocation2 + $0xb2] sm:$0xff]
      %v720 = vld [vmem:[#allocation2 + $0xc2] sm:$0xff]
      %v721 = vld [vmem:[#allocation2 + $0xca] sm:$0xff]
      %v722 = vld [vmem:[#allocation2 + $0xda] sm:$0xff]
      %v723 = vld [vmem:[#allocation2 + $0xe2] sm:$0xff]
      %v724 = vld [vmem:[%s2 + $0x2] sm:$0x1]
      %v725 = vlaneseq
      %v726 = vshrl.u32 %v725, 7
      %v727 = vsub.s32 0, %v726
      %v728 = vrot.slane %v724, %v727
      %v729 = vmul.f32 %v704, %v728
      %v730 = vmul.f32 %v705, %v728
      %v731 = vmul.f32 %v706, %v728
      %v732 = vmul.f32 %v707, %v728
      %v733 = vmul.f32 %v708, %v728
      %v734 = vmul.f32 %v709, %v728
      %v735 = vmul.f32 %v710, %v728
      %v736 = vmul.f32 %v711, %v728
      %v737 = vmul.f32 %v712, %v728
      %v738 = vmul.f32 %v713, %v728
      %v739 = vmul.f32 %v714, %v728
      %v740 = vmul.f32 %v715, %v728
      %v741 = vmul.f32 %v716, %v728
      %v742 = vmul.f32 %v717, %v728
      %v743 = vmul.f32 %v718, %v728
      %v744 = vmul.f32 %v719, %v728
      %v745 = vadd.f32 %v688, %v729
      %v746 = vadd.f32 %v689, %v730
      %v747 = vadd.f32 %v690, %v731
      %v748 = vadd.f32 %v691, %v732
      %v749 = vadd.f32 %v692, %v733
      %v750 = vadd.f32 %v693, %v734
      %v751 = vadd.f32 %v694, %v735
      %v752 = vadd.f32 %v695, %v736
      %v753 = vadd.f32 %v696, %v737
      %v754 = vadd.f32 %v697, %v738
      %v755 = vadd.f32 %v698, %v739
      %v756 = vadd.f32 %v699, %v740
      %v757 = vadd.f32 %v700, %v741
      %v758 = vadd.f32 %v701, %v742
      %v759 = vadd.f32 %v702, %v743
      %v760 = vadd.f32 %v703, %v744
      %v761 = vld [vmem:[%s497 + $0x2] sm:$0x1]
      %v762 = vlaneseq
      %v763 = vshrl.u32 %v762, 7
      %v764 = vsub.s32 0, %v763
      %v765 = vrot.slane %v761, %v764
      %v766 = vmul.f32 %v706, %v765
      %v767 = vmul.f32 %v707, %v765
      %v768 = vmul.f32 %v708, %v765
      %v769 = vmul.f32 %v709, %v765
      %v770 = vmul.f32 %v710, %v765
      %v771 = vmul.f32 %v711, %v765
      %v772 = vmul.f32 %v712, %v765
      %v773 = vmul.f32 %v713, %v765
      %v774 = vmul.f32 %v714, %v765
      %v775 = vmul.f32 %v715, %v765
      %v776 = vmul.f32 %v716, %v765
      %v777 = vmul.f32 %v717, %v765
      %v778 = vmul.f32 %v718, %v765
      %v779 = vmul.f32 %v719, %v765
      %v780 = vmul.f32 %v720, %v765
      %v781 = vmul.f32 %v721, %v765
      %v782 = vadd.f32 %v745, %v766
      %v783 = vadd.f32 %v746, %v767
      %v784 = vadd.f32 %v747, %v768
      %v785 = vadd.f32 %v748, %v769
      %v786 = vadd.f32 %v749, %v770
      %v787 = vadd.f32 %v750, %v771
      %v788 = vadd.f32 %v751, %v772
      %v789 = vadd.f32 %v752, %v773
      %v790 = vadd.f32 %v753, %v774
      %v791 = vadd.f32 %v754, %v775
      %v792 = vadd.f32 %v755, %v776
      %v793 = vadd.f32 %v756, %v777
      %v794 = vadd.f32 %v757, %v778
      %v795 = vadd.f32 %v758, %v779
      %v796 = vadd.f32 %v759, %v780
      %v797 = vadd.f32 %v760, %v781
      %v798 = vld [vmem:[%s535 + $0x2] sm:$0x1]
      %v799 = vlaneseq
      %v800 = vshrl.u32 %v799, 7
      %v801 = vsub.s32 0, %v800
      %v802 = vrot.slane %v798, %v801
      %v803 = vmul.f32 %v708, %v802
      %v804 = vmul.f32 %v709, %v802
      %v805 = vmul.f32 %v710, %v802
      %v806 = vmul.f32 %v711, %v802
      %v807 = vmul.f32 %v712, %v802
      %v808 = vmul.f32 %v713, %v802
      %v809 = vmul.f32 %v714, %v802
      %v810 = vmul.f32 %v715, %v802
      %v811 = vmul.f32 %v716, %v802
      %v812 = vmul.f32 %v717, %v802
      %v813 = vmul.f32 %v718, %v802
      %v814 = vmul.f32 %v719, %v802
      %v815 = vmul.f32 %v720, %v802
      %v816 = vmul.f32 %v721, %v802
      %v817 = vmul.f32 %v722, %v802
      %v818 = vmul.f32 %v723, %v802
      %v819 = vadd.f32 %v782, %v803
      %v820 = vadd.f32 %v783, %v804
      %v821 = vadd.f32 %v784, %v805
      %v822 = vadd.f32 %v785, %v806
      %v823 = vadd.f32 %v786, %v807
      %v824 = vadd.f32 %v787, %v808
      %v825 = vadd.f32 %v788, %v809
      %v826 = vadd.f32 %v789, %v810
      %v827 = vadd.f32 %v790, %v811
      %v828 = vadd.f32 %v791, %v812
      %v829 = vadd.f32 %v792, %v813
      %v830 = vadd.f32 %v793, %v814
      %v831 = vadd.f32 %v794, %v815
      %v832 = vadd.f32 %v795, %v816
      %v833 = vadd.f32 %v796, %v817
      %v834 = vadd.f32 %v797, %v818
      %v835 = vld [vmem:[%s3] sm:$0xf]
      %v836 = vld [vmem:[%s4] sm:$0x1]
      %v838 = vlaneseq
      %v839 = vshrl.u32 %v838, 7
      %v840 = vsub.s32 0, %v839
      %v841 = vrot.slane %v836, %v840
      %v844 = vsel %vm395, %v819, 0
      %v847 = vsel %vm395, %v820, 0
      %v850 = vsel %vm395, %v821, 0
      %v853 = vsel %vm395, %v822, 0
      %v856 = vsel %vm395, %v823, 0
      %v859 = vsel %vm395, %v824, 0
      %v862 = vsel %vm395, %v825, 0
      %v865 = vsel %vm395, %v826, 0
      %v868 = vsel %vm395, %v827, 0
      %v871 = vsel %vm395, %v828, 0
      %v874 = vsel %vm395, %v829, 0
      %v877 = vsel %vm395, %v830, 0
      %v880 = vsel %vm395, %v831, 0
      %v883 = vsel %vm395, %v832, 0
      %v886 = vsel %vm395, %v833, 0
      %v889 = vsel %vm395, %v834, 0
      %vm891 = vcmask 1043456
      %v893 = vsel %vm891, %v835, 0
      %895 = vmatprep.subr.mxu0 0.0
      %896 = vmatpush1.msra.mxu0 0.0
      %897 = vmatprep.subr.mxu0 0.0
      %898 = vmatpush1.msra.mxu0 0.0
      %899 = vmatprep.subr.mxu0 0.0
      %900 = vmatpush1.msra.mxu0 0.0
      %901 = vmatprep.subr.mxu0 0.0
      %902 = vmatpush1.msra.mxu0 0.0
      %903 = vmatprep.subr.mxu0 0.0
      %904 = vmatpush1.msra.mxu0 0.0
      %905 = vmatprep.subr.mxu0 0.0
      %906 = vmatpush1.msra.mxu0 0.0
      %907 = vmatprep.subr.mxu0 0.0
      %908 = vmatpush1.msra.mxu0 0.0
      %909 = vmatprep.subr.mxu0 0.0
      %910 = vmatpush1.msra.mxu0 0.0
      %911 = vmatprep.subr.mxu0 0.0
      %912 = vmatpush1.msra.mxu0 0.0
      %913 = vmatprep.subr.mxu0 0.0
      %914 = vmatpush1.msra.mxu0 0.0
      %915 = vmatprep.subr.mxu0 0.0
      %916 = vmatpush1.msra.mxu0 0.0
      %917 = vmatprep.subr.mxu0 0.0
      %918 = vmatpush1.msra.mxu0 0.0
      %919 = vmatprep.subr.mxu0 0.0
      %920 = vmatpush1.msra.mxu0 0.0
      %921 = vmatprep.subr.mxu0 0.0
      %922 = vmatpush1.msra.mxu0 0.0
      %923 = vmatprep.subr.mxu0 0.0
      %924 = vmatpush1.msra.mxu0 0.0
      %925 = vmatprep.subr.mxu0 0.0
      %926 = vmatpush1.msra.mxu0 %v893
      %927 = vmatprep.subr.mxu0 0.0
      %928 = vmatpush2.msra.mxu0 0.0
      %929 = vmatprep.subr.mxu0 0.0
      %930 = vmatpush2.msra.mxu0 0.0
      %931 = vmatprep.subr.mxu0 0.0
      %932 = vmatpush2.msra.mxu0 0.0
      %933 = vmatprep.subr.mxu0 0.0
      %934 = vmatpush2.msra.mxu0 0.0
      %935 = vmatprep.subr.mxu0 0.0
      %936 = vmatpush2.msra.mxu0 0.0
      %937 = vmatprep.subr.mxu0 0.0
      %938 = vmatpush2.msra.mxu0 0.0
      %939 = vmatprep.subr.mxu0 0.0
      %940 = vmatpush2.msra.mxu0 0.0
      %941 = vmatprep.subr.mxu0 0.0
      %942 = vmatpush2.msra.mxu0 0.0
      %943 = vmatprep.subr.mxu0 0.0
      %944 = vmatpush2.msra.mxu0 0.0
      %945 = vmatprep.subr.mxu0 0.0
      %946 = vmatpush2.msra.mxu0 0.0
      %947 = vmatprep.subr.mxu0 0.0
      %948 = vmatpush2.msra.mxu0 0.0
      %949 = vmatprep.subr.mxu0 0.0
      %950 = vmatpush2.msra.mxu0 0.0
      %951 = vmatprep.subr.mxu0 0.0
      %952 = vmatpush2.msra.mxu0 0.0
      %953 = vmatprep.subr.mxu0 0.0
      %954 = vmatpush2.msra.mxu0 0.0
      %955 = vmatprep.subr.mxu0 0.0
      %956 = vmatpush2.msra.mxu0 0.0
      %957 = vmatprep.subr.mxu0 0.0
      %958 = vmatpush2.msra.mxu0 0.0
      %959 = vmatprep.mubr.f32.mxu0 0.0
      %960 = vmatmul.mubr.f32.gmra.mxu0 %v844
      %v961 = vpop.f32.mrf.mxu0
      %v962 = vadd.f32 %v841, %v961
      %v963 = vpop.f32.mrf.mxu0
      %964 = vmatprep.mubr.f32.mxu0 0.0
      %965 = vmatmul.mubr.f32.gmra.mxu0 %v847
      %v966 = vpop.f32.mrf.mxu0
      %v967 = vadd.f32 %v841, %v966
      %v968 = vpop.f32.mrf.mxu0
      %969 = vmatprep.mubr.f32.mxu0 0.0
      %970 = vmatmul.mubr.f32.gmra.mxu0 %v850
      %v971 = vpop.f32.mrf.mxu0
      %v972 = vadd.f32 %v841, %v971
      %v973 = vpop.f32.mrf.mxu0
      %974 = vmatprep.mubr.f32.mxu0 0.0
      %975 = vmatmul.mubr.f32.gmra.mxu0 %v853
      %v976 = vpop.f32.mrf.mxu0
      %v977 = vadd.f32 %v841, %v976
      %v978 = vpop.f32.mrf.mxu0
      %979 = vmatprep.mubr.f32.mxu0 0.0
      %980 = vmatmul.mubr.f32.gmra.mxu0 %v856
      %v981 = vpop.f32.mrf.mxu0
      %v982 = vadd.f32 %v841, %v981
      %v983 = vpop.f32.mrf.mxu0
      %984 = vmatprep.mubr.f32.mxu0 0.0
      %985 = vmatmul.mubr.f32.gmra.mxu0 %v859
      %v986 = vpop.f32.mrf.mxu0
      %v987 = vadd.f32 %v841, %v986
      %v988 = vpop.f32.mrf.mxu0
      %989 = vmatprep.mubr.f32.mxu0 0.0
      %990 = vmatmul.mubr.f32.gmra.mxu0 %v862
      %v991 = vpop.f32.mrf.mxu0
      %v992 = vadd.f32 %v841, %v991
      %v993 = vpop.f32.mrf.mxu0
      %994 = vmatprep.mubr.f32.mxu0 0.0
      %995 = vmatmul.mubr.f32.gmra.mxu0 %v865
      %v996 = vpop.f32.mrf.mxu0
      %v997 = vadd.f32 %v841, %v996
      %v998 = vpop.f32.mrf.mxu0
      %999 = vmatprep.mubr.f32.mxu0 0.0
      %1000 = vmatmul.mubr.f32.gmra.mxu0 %v868
      %v1001 = vpop.f32.mrf.mxu0
      %v1002 = vadd.f32 %v841, %v1001
      %v1003 = vpop.f32.mrf.mxu0
      %1004 = vmatprep.mubr.f32.mxu0 0.0
      %1005 = vmatmul.mubr.f32.gmra.mxu0 %v871
      %v1006 = vpop.f32.mrf.mxu0
      %v1007 = vadd.f32 %v841, %v1006
      %v1008 = vpop.f32.mrf.mxu0
      %1009 = vmatprep.mubr.f32.mxu0 0.0
      %1010 = vmatmul.mubr.f32.gmra.mxu0 %v874
      %v1011 = vpop.f32.mrf.mxu0
      %v1012 = vadd.f32 %v841, %v1011
      %v1013 = vpop.f32.mrf.mxu0
      %1014 = vmatprep.mubr.f32.mxu0 0.0
      %1015 = vmatmul.mubr.f32.gmra.mxu0 %v877
      %v1016 = vpop.f32.mrf.mxu0
      %v1017 = vadd.f32 %v841, %v1016
      %v1018 = vpop.f32.mrf.mxu0
      %1019 = vmatprep.mubr.f32.mxu0 0.0
      %1020 = vmatmul.mubr.f32.gmra.mxu0 %v880
      %v1021 = vpop.f32.mrf.mxu0
      %v1022 = vadd.f32 %v841, %v1021
      %v1023 = vpop.f32.mrf.mxu0
      %1024 = vmatprep.mubr.f32.mxu0 0.0
      %1025 = vmatmul.mubr.f32.gmra.mxu0 %v883
      %v1026 = vpop.f32.mrf.mxu0
      %v1027 = vadd.f32 %v841, %v1026
      %v1028 = vpop.f32.mrf.mxu0
      %1029 = vmatprep.mubr.f32.mxu0 0.0
      %1030 = vmatmul.mubr.f32.gmra.mxu0 %v886
      %v1031 = vpop.f32.mrf.mxu0
      %v1032 = vadd.f32 %v841, %v1031
      %v1033 = vpop.f32.mrf.mxu0
      %1034 = vmatprep.mubr.f32.mxu0 0.0
      %1035 = vmatmul.mubr.f32.gmra.mxu0 %v889
      %v1036 = vpop.f32.mrf.mxu0
      %v1037 = vadd.f32 %v841, %v1036
      %v1038 = vpop.f32.mrf.mxu0
      %1039 = vdwg.mxu0
      %vm1040 = vcmask 64512
      %1041 = vst.msk [vmem:[%s345] sm:$0xff] %vm1040, %v962
      %1042 = vst.msk [vmem:[%s345 + $0x8] sm:$0xff] %vm1040, %v967
      %1043 = vst.msk [vmem:[%s345 + $0x10] sm:$0xff] %vm1040, %v972
      %1044 = vst.msk [vmem:[%s345 + $0x18] sm:$0xff] %vm1040, %v977
      %1045 = vst.msk [vmem:[%s345 + $0x20] sm:$0xff] %vm1040, %v982
      %1046 = vst.msk [vmem:[%s345 + $0x28] sm:$0xff] %vm1040, %v987
      %1047 = vst.msk [vmem:[%s345 + $0x30] sm:$0xff] %vm1040, %v992
      %1048 = vst.msk [vmem:[%s345 + $0x38] sm:$0xff] %vm1040, %v997
      %1049 = vst.msk [vmem:[%s345 + $0x40] sm:$0xff] %vm1040, %v1002
      %1050 = vst.msk [vmem:[%s345 + $0x48] sm:$0xff] %vm1040, %v1007
      %1051 = vst.msk [vmem:[%s345 + $0x50] sm:$0xff] %vm1040, %v1012
      %1052 = vst.msk [vmem:[%s345 + $0x58] sm:$0xff] %vm1040, %v1017
      %1053 = vst.msk [vmem:[%s345 + $0x60] sm:$0xff] %vm1040, %v1022
      %1054 = vst.msk [vmem:[%s345 + $0x68] sm:$0xff] %vm1040, %v1027
      %1055 = vst.msk [vmem:[%s345 + $0x70] sm:$0xff] %vm1040, %v1032
      %1056 = vst.msk [vmem:[%s345 + $0x78] sm:$0xff] %vm1040, %v1037
      %s1057 = smul.u32 8, %s21
      %p1058 = scmp.lt.s32.totalorder %s20, 1
      %s1059 = scalar_select %p1058, %s20, 1
      %p1060 = scmp.lt.s32.totalorder %s1057, 15
      %s1061 = scalar_select %p1060, %s1057, 15
      %s1062 = smul.addr %s1061, 2
      %s1063 = smul.addr %s1059, 32
      %s1064 = sadd.s32 %s1062, %s1063
      %s1065 = smul.addr %s1064, 8
      %s1066 = scalar_lea.vmem %s5, %s1065
      // Predicated region
      $region41: #{tpu_custom_call.1} parent=39 // pred_check
        %p1067 = pneg %p171
      $region42: #{tpu_custom_call.1} parent=39 // pred_check_branch
        %1069 = sbr.rel (%p1067) target = $region44
      $region43: #{tpu_custom_call.1} parent=39 // pred_region
        %s1070 = smul.u32 8, %s21
      $region44: #{tpu_custom_call.1} parent=39 // pred_fallthru
        _
    $region40: #{tpu_custom_call.1} parent=5 // pred_fallthru
      _
    %p1071 = scmp.le.s32.totalorder 2, %s11
    // Predicated region
    $region45: #{tpu_custom_call.1} parent=5 // pred_check
      %p1072 = pneg %p1071
    $region46: #{tpu_custom_call.1} parent=5 // pred_check_branch
      %1074 = sbr.rel (%p1072) target = $region48
    $region47: #{tpu_custom_call.1} parent=5 // pred_region
      %s1075 = ssub.s32 %s11, 2
      // Predicated region
      $region49: #{tpu_custom_call.1} parent=47 // pred_check
        %p1076 = pneg %p177
      $region50: #{tpu_custom_call.1} parent=47 // pred_check_branch
        %1078 = sbr.rel (%p1076) target = $region52
      $region51: #{tpu_custom_call.1} parent=47 // pred_region
        %s1079 = smul.u32 8, %s23
        %p1080 = scmp.lt.s32.totalorder %s22, 1
        %s1081 = scalar_select %p1080, %s22, 1
        %p1082 = scmp.lt.s32.totalorder %s1079, 15
        %s1083 = scalar_select %p1082, %s1079, 15
        %s1084 = smul.addr %s1083, 2
        %s1085 = smul.addr %s1081, 32
        %s1086 = sadd.s32 %s1084, %s1085
        %s1087 = smul.addr %s1086, 8
        %s1088 = scalar_lea.vmem %s5, %s1087
      $region52: #{tpu_custom_call.1} parent=47 // pred_fallthru
        _
    $region48: #{tpu_custom_call.1} parent=5 // pred_fallthru
      _
  $region6: #{tpu_custom_call.1} parent=0 // loop_footer
    %s15 = sadd.s32 1, %s11
  $region7: #{tpu_custom_call.1} parent=0 // loop_footer_branch
    %10 = sbr.rel target = $region3
  $region8: #{tpu_custom_call.1} parent=0 // loop_exit
    _

</llo_original>
